<compile_context>
chip_gen: v6e
topology: v6e:2x2x1
jax: 0.10.0
libtpu: 0.0.40
codegen_flags: <defaults>
</compile_context>

<pallas_src>
import jax
import jax.numpy as jnp
from jax.experimental import pallas as pl
from jax.experimental.pallas import tpu as pltpu

INPUT_SIZE = 28 * 28     # 784
OUTPUT_SIZE = 10
N_PAD = 128              # lane-dense / MXU-width padded output dim
TM_MAX = 1024            # max batch-tile rows (multiple of 16 for bf16 packing)


def _round_up(x, m):
    return ((x + m - 1) // m) * m


def linear_kernel(x_ref, wt_ref, b_ref, o_ref):
    # x_ref:  [tm, 784]   bf16  (VMEM tile of the batch)
    # wt_ref: [784, 128]  bf16  (W^T zero-padded, resident across the grid)
    # b_ref:  [1, 128]    f32   (bias zero-padded, resident)
    # o_ref:  [tm, 128]   f32   (lane-dense output tile)
    acc = jnp.dot(x_ref[...], wt_ref[...], preferred_element_type=jnp.float32)
    o_ref[...] = acc + b_ref[...]


def prepare_params(weight, bias):
    """One-time parameter prep: transpose, pad N 10->128, cast bf16."""
    wt = jnp.zeros((INPUT_SIZE, N_PAD), jnp.bfloat16)
    wt = wt.at[:, :OUTPUT_SIZE].set(weight.T.astype(jnp.bfloat16))
    b = jnp.zeros((1, N_PAD), jnp.float32)
    b = b.at[0, :OUTPUT_SIZE].set(bias.astype(jnp.float32))
    return wt, b


@jax.jit
def mnist_model_forward(x, wt_padded, b_padded):
    """Forward pass matching MnistModel.forward.

    x:         float32, any shape reshapeable to [-1, 784] (e.g. [B, 1, 28, 28])
    wt_padded: bfloat16 [784, 128]  (from prepare_params)
    b_padded:  float32  [1, 128]    (from prepare_params)
    returns    float32 [B, 10]
    """
    xb = x.reshape(-1, INPUT_SIZE).astype(jnp.bfloat16)
    B = xb.shape[0]

    if B <= TM_MAX:
        # Single block == full (padded) array extent: always layout-legal.
        tm = _round_up(B, 16)
    else:
        tm = TM_MAX
    B_pad = _round_up(B, tm)
    if B_pad != B:
        xb = jnp.pad(xb, ((0, B_pad - B), (0, 0)))
    grid = (B_pad // tm,)

    bytes_accessed = (B_pad * INPUT_SIZE * 2        # x (bf16)
                      + INPUT_SIZE * N_PAD * 2      # W^T (bf16)
                      + N_PAD * 4                   # bias (f32)
                      + B_pad * N_PAD * 4)          # out (f32)

    out = pl.pallas_call(
        linear_kernel,
        out_shape=jax.ShapeDtypeStruct((B_pad, N_PAD), jnp.float32),
        grid=grid,
        in_specs=[
            pl.BlockSpec((tm, INPUT_SIZE), lambda i: (i, 0)),      # x tile
            pl.BlockSpec((INPUT_SIZE, N_PAD), lambda i: (0, 0)),   # resident W^T
            pl.BlockSpec((1, N_PAD), lambda i: (0, 0)),            # resident bias
        ],
        out_specs=pl.BlockSpec((tm, N_PAD), lambda i: (i, 0)),
        compiler_params=pltpu.CompilerParams(
            dimension_semantics=("parallel",)),
        cost_estimate=pl.CostEstimate(
            flops=2 * B_pad * INPUT_SIZE * N_PAD,
            transcendentals=0,
            bytes_accessed=bytes_accessed),
    )(xb, wt_padded, b_padded)

    return out[:B, :OUTPUT_SIZE]


def init_params(key):
    # Deterministic init mimicking PyTorch nn.Linear default:
    # U(-1/sqrt(fan_in), 1/sqrt(fan_in))
    kw, kb = jax.random.split(key)
    bound = 1.0 / jnp.sqrt(jnp.float32(INPUT_SIZE))
    weight = jax.random.uniform(
        kw, (OUTPUT_SIZE, INPUT_SIZE), jnp.float32, minval=-bound, maxval=bound)
    bias = jax.random.uniform(
        kb, (OUTPUT_SIZE,), jnp.float32, minval=-bound, maxval=bound)
    return weight, bias


if __name__ == "__main__":
    key = jax.random.PRNGKey(0)
    kx, kp = jax.random.split(key)

    B = 2
    x = jax.random.normal(kx, (B, 1, 28, 28), jnp.float32)  # NCHW, like MNIST
    weight, bias = init_params(kp)

    wt_padded, b_padded = prepare_params(weight, bias)
    out = mnist_model_forward(x, wt_padded, b_padded)
    out = jax.block_until_ready(out)

    # Reference 1: same bf16 inputs, f32 accumulation (tight tolerance).
    xb_bf = x.reshape(-1, INPUT_SIZE).astype(jnp.bfloat16).astype(jnp.float32)
    w_bf = weight.astype(jnp.bfloat16).astype(jnp.float32)
    ref_bf = xb_bf @ w_bf.T + bias
    # Reference 2: full f32 (loose tolerance to cover the bf16 input cast).
    ref_f32 = x.reshape(-1, INPUT_SIZE) @ weight.T + bias

    assert out.shape == (B, OUTPUT_SIZE)
    assert jnp.allclose(out, ref_bf, atol=1e-3, rtol=1e-3)
    assert jnp.allclose(out, ref_f32, atol=2e-2, rtol=2e-2)

    print("KERNEL_OK")
</pallas_src>

<mosaic_0001>
module attributes {stable_mosaic.version = 11 : i64} {
  func.func @linear_kernel(%arg0: i32, %arg1: memref<16x784xbf16, #tpu.memory_space<vmem>>, %arg2: memref<784x128xbf16, #tpu.memory_space<vmem>>, %arg3: memref<1x128xf32, #tpu.memory_space<vmem>>, %arg4: memref<16x128xf32, #tpu.memory_space<vmem>>) attributes {dimension_semantics = [#tpu.dimension_semantics<parallel>], iteration_bounds = array<i64: 1>, scalar_prefetch = 0 : i64, scratch_operands = 0 : i64, tpu.core_type = #tpu.core_type<tc>, window_params = [{transform_indices = @transform_0, window_bounds = array<i64: 16, 784>}, {pipeline_mode = #tpu.pipeline_mode<synchronous>, transform_indices = @transform_1, window_bounds = array<i64: 784, 128>}, {pipeline_mode = #tpu.pipeline_mode<synchronous>, transform_indices = @transform_2, window_bounds = array<i64: 1, 128>}, {transform_indices = @transform_3, window_bounds = array<i64: 16, 128>}]} {
    %c0 = arith.constant 0 : index
    %c0_0 = arith.constant 0 : index
    %0 = vector.load %arg1[%c0, %c0_0] : memref<16x784xbf16, #tpu.memory_space<vmem>>, vector<16x784xbf16>
    %c0_1 = arith.constant 0 : index
    %c0_2 = arith.constant 0 : index
    %1 = vector.load %arg2[%c0_1, %c0_2] : memref<784x128xbf16, #tpu.memory_space<vmem>>, vector<784x128xbf16>
    %cst = arith.constant dense<0.000000e+00> : vector<16x128xf32>
    %2 = tpu.matmul %0, %1, %cst {dimension_numbers = #tpu.dot_dimension_numbers<[1], [0], [0], [1], [0, 0, 1, 1], [], []>} : vector<16x784xbf16>, vector<784x128xbf16>, vector<16x128xf32> -> vector<16x128xf32>
    %c0_3 = arith.constant 0 : index
    %c0_4 = arith.constant 0 : index
    %3 = vector.load %arg3[%c0_3, %c0_4] : memref<1x128xf32, #tpu.memory_space<vmem>>, vector<1x128xf32>
    %4 = vector.broadcast %3 : vector<1x128xf32> to vector<16x128xf32>
    %5 = arith.addf %2, %4 : vector<16x128xf32>
    %c0_5 = arith.constant 0 : index
    %c0_6 = arith.constant 0 : index
    %6 = vector.load %arg4[%c0_5, %c0_6] : memref<16x128xf32, #tpu.memory_space<vmem>>, vector<16x128xf32>
    tpu.vector_store %arg4[%c0_5, %c0_6], %5 {strides = array<i32>} : memref<16x128xf32, #tpu.memory_space<vmem>>, vector<16x128xf32>,
    return
  }
  func.func @transform_0(%arg0: i32) -> (i32, i32) {
    %c0_i32 = arith.constant 0 : i32
    %c0_i32_0 = arith.constant 0 : i32
    return %arg0, %c0_i32 : i32, i32
  }
  func.func @transform_1(%arg0: i32) -> (i32, i32) {
    %c0_i32 = arith.constant 0 : i32
    %c0_i32_0 = arith.constant 0 : i32
    %c0_i32_1 = arith.constant 0 : i32
    return %c0_i32, %c0_i32_0 : i32, i32
  }
  func.func @transform_2(%arg0: i32) -> (i32, i32) {
    %c0_i32 = arith.constant 0 : i32
    %c0_i32_0 = arith.constant 0 : i32
    %c0_i32_1 = arith.constant 0 : i32
    return %c0_i32, %c0_i32_0 : i32, i32
  }
  func.func @transform_3(%arg0: i32) -> (i32, i32) {
    %c0_i32 = arith.constant 0 : i32
    %c0_i32_0 = arith.constant 0 : i32
    return %arg0, %c0_i32 : i32, i32
  }
}

</mosaic_0001>

<llo_original>
// kernel: mnist_model_forward.1
$region0: #{mnist_model_forward.1}
  #allocation0 [shape = 'u32[]', space=smem, size = 0x4, offset = 0x4, fixed_abs, tag = 'smem constant byte address 0x4 - core index']
  #allocation1 [shape = 'u32[144,128]{1,0:T(1,128)}', space=vmem, size = 0x12000, scoped, tag = 'internal scratch']
  %s0 = inlined_call_operand.vmem [shape: bf16[16,784], index: 0, kind: input, shape index: {}]
  %s1 = inlined_call_operand.hbm [shape: bf16[784,128], index: 1, kind: input, shape index: {}]
  %s2 = inlined_call_operand.vmem [shape: f32[1,128], index: 2, kind: input, shape index: {}]
  %s3 = inlined_call_operand.vmem [shape: f32[16,128], index: 3, kind: output, shape index: {}]
  %s4 = sld [smem:[#allocation0]]
  $region26: #{mnist_model_forward.1} parent=0
    _
  %s6 = ssub.s32 1, %s4
  %s7 = scalar_select 0, %s6, %s4
  $region1: #{mnist_model_forward.1} parent=0
    #allocation2 [shape = 'u8[200704]{0}', space=vmem, size = 0x31000, scoped, tag = 'input window, operand 1, single buffered']
    #allocation3 [shape = 's32[1]{0}', space=sflag, size = 0x4, scoped, tag = 'scoped memory for mnist_model_forward.1']
    %8 = vsyncpa [#allocation3], 0
    // Predicated region
    $region2: #{mnist_model_forward.1} parent=1 // pred_check
      _
    $region3: #{mnist_model_forward.1} parent=1 // pred_check_branch
      %10 = sbr.rel (0) target = $region5
    $region4: #{mnist_model_forward.1} parent=1 // pred_region
      _
    $region5: #{mnist_model_forward.1} parent=1 // pred_fallthru
      _
    // Predicated region
    $region6: #{mnist_model_forward.1} parent=1 // pred_check
      _
    $region7: #{mnist_model_forward.1} parent=1 // pred_check_branch
      %12 = sbr.rel (0) target = $region9
    $region8: #{mnist_model_forward.1} parent=1 // pred_region
      %s14 = ssub.s32 6272, 6272
      %15 = vsyncadd [#allocation3], %s14
      %s16 = sshll.u32 [#allocation2], 4
      %s17 = int_to_ptr.vmem [resolvable:$true] %s16
      %22 = dma.hbm_to_vmem [thread:$0]  %s1, 6272, %s17, [#allocation3], 64, 64, 4
    $region9: #{mnist_model_forward.1} parent=1 // pred_fallthru
      _
    // Predicated region
    $region10: #{mnist_model_forward.1} parent=1 // pred_check
      _
    $region11: #{mnist_model_forward.1} parent=1 // pred_check_branch
      %24 = sbr.rel (0) target = $region13
    $region12: #{mnist_model_forward.1} parent=1 // pred_region
      _
    $region13: #{mnist_model_forward.1} parent=1 // pred_fallthru
      _
    // Predicated region
    $region14: #{mnist_model_forward.1} parent=1 // pred_check
      _
    $region15: #{mnist_model_forward.1} parent=1 // pred_check_branch
      %26 = sbr.rel (0) target = $region17
    $region16: #{mnist_model_forward.1} parent=1 // pred_region
      %27 = dma.done [#allocation3], 6272
    $region17: #{mnist_model_forward.1} parent=1 // pred_fallthru
      _
    %v29 = vld [vmem:[%s0] sm:$0xff]
    %v30 = vld [vmem:[%s0 + $0x8] sm:$0xff]
    %v31 = vld [vmem:[%s0 + $0x10] sm:$0xff]
    %v32 = vld [vmem:[%s0 + $0x18] sm:$0xf]
    %v33 = vld [vmem:[%s0 + $0x1c] sm:$0xff]
    %v34 = vld [vmem:[%s0 + $0x24] sm:$0xff]
    %v35 = vld [vmem:[%s0 + $0x2c] sm:$0xff]
    %v36 = vld [vmem:[%s0 + $0x34] sm:$0xf]
    %v37 = vld [vmem:[#allocation2] sm:$0xf]
    %v38 = vld [vmem:[#allocation2 + $0x4] sm:$0xf]
    %v39 = vld [vmem:[#allocation2 + $0x8] sm:$0xf]
    %v40 = vld [vmem:[#allocation2 + $0xc] sm:$0xf]
    %v41 = vld [vmem:[#allocation2 + $0x10] sm:$0xf]
    %v42 = vld [vmem:[#allocation2 + $0x14] sm:$0xf]
    %v43 = vld [vmem:[#allocation2 + $0x18] sm:$0xf]
    %v44 = vld [vmem:[#allocation2 + $0x1c] sm:$0xf]
    %v45 = vld [vmem:[#allocation2 + $0x20] sm:$0xf]
    %v46 = vld [vmem:[#allocation2 + $0x24] sm:$0xf]
    %v47 = vld [vmem:[#allocation2 + $0x28] sm:$0xf]
    %v48 = vld [vmem:[#allocation2 + $0x2c] sm:$0xf]
    %v49 = vld [vmem:[#allocation2 + $0x30] sm:$0xf]
    %v50 = vld [vmem:[#allocation2 + $0x34] sm:$0xf]
    %v51 = vld [vmem:[#allocation2 + $0x38] sm:$0xf]
    %v52 = vld [vmem:[#allocation2 + $0x3c] sm:$0xf]
    %v53 = vld [vmem:[#allocation2 + $0x40] sm:$0xf]
    %v54 = vld [vmem:[#allocation2 + $0x44] sm:$0xf]
    %v55 = vld [vmem:[#allocation2 + $0x48] sm:$0xf]
    %v56 = vld [vmem:[#allocation2 + $0x4c] sm:$0xf]
    %v57 = vld [vmem:[#allocation2 + $0x50] sm:$0xf]
    %v58 = vld [vmem:[#allocation2 + $0x54] sm:$0xf]
    %v59 = vld [vmem:[#allocation2 + $0x58] sm:$0xf]
    %v60 = vld [vmem:[#allocation2 + $0x5c] sm:$0xf]
    %v61 = vld [vmem:[#allocation2 + $0x60] sm:$0xf]
    %v62 = vld [vmem:[#allocation2 + $0x64] sm:$0xf]
    %v63 = vld [vmem:[#allocation2 + $0x68] sm:$0xf]
    %v64 = vld [vmem:[#allocation2 + $0x6c] sm:$0xf]
    %v65 = vld [vmem:[#allocation2 + $0x70] sm:$0xf]
    %v66 = vld [vmem:[#allocation2 + $0x74] sm:$0xf]
    %v67 = vld [vmem:[#allocation2 + $0x78] sm:$0xf]
    %v68 = vld [vmem:[#allocation2 + $0x7c] sm:$0xf]
    %v69 = vld [vmem:[#allocation2 + $0x80] sm:$0xf]
    %v70 = vld [vmem:[#allocation2 + $0x84] sm:$0xf]
    %v71 = vld [vmem:[#allocation2 + $0x88] sm:$0xf]
    %v72 = vld [vmem:[#allocation2 + $0x8c] sm:$0xf]
    %v73 = vld [vmem:[#allocation2 + $0x90] sm:$0xf]
    %v74 = vld [vmem:[#allocation2 + $0x94] sm:$0xf]
    %v75 = vld [vmem:[#allocation2 + $0x98] sm:$0xf]
    %v76 = vld [vmem:[#allocation2 + $0x9c] sm:$0xf]
    %v77 = vld [vmem:[#allocation2 + $0xa0] sm:$0xf]
    %v78 = vld [vmem:[#allocation2 + $0xa4] sm:$0xf]
    %v79 = vld [vmem:[#allocation2 + $0xa8] sm:$0xf]
    %v80 = vld [vmem:[#allocation2 + $0xac] sm:$0xf]
    %v81 = vld [vmem:[#allocation2 + $0xb0] sm:$0xf]
    %v82 = vld [vmem:[#allocation2 + $0xb4] sm:$0xf]
    %v83 = vld [vmem:[#allocation2 + $0xb8] sm:$0xf]
    %v84 = vld [vmem:[#allocation2 + $0xbc] sm:$0xf]
    %v85 = vld [vmem:[#allocation2 + $0xc0] sm:$0xf]
    %v86 = vld [vmem:[#allocation2 + $0xc4] sm:$0xf]
    %v87 = vld [vmem:[#allocation2 + $0xc8] sm:$0xf]
    %v88 = vld [vmem:[#allocation2 + $0xcc] sm:$0xf]
    %v89 = vld [vmem:[#allocation2 + $0xd0] sm:$0xf]
    %v90 = vld [vmem:[#allocation2 + $0xd4] sm:$0xf]
    %v91 = vld [vmem:[#allocation2 + $0xd8] sm:$0xf]
    %v92 = vld [vmem:[#allocation2 + $0xdc] sm:$0xf]
    %v93 = vld [vmem:[#allocation2 + $0xe0] sm:$0xf]
    %v94 = vld [vmem:[#allocation2 + $0xe4] sm:$0xf]
    %v95 = vld [vmem:[#allocation2 + $0xe8] sm:$0xf]
    %v96 = vld [vmem:[#allocation2 + $0xec] sm:$0xf]
    %v97 = vld [vmem:[#allocation2 + $0xf0] sm:$0xf]
    %v98 = vld [vmem:[#allocation2 + $0xf4] sm:$0xf]
    %v99 = vld [vmem:[#allocation2 + $0xf8] sm:$0xf]
    %v100 = vld [vmem:[#allocation2 + $0xfc] sm:$0xf]
    %v101 = vld [vmem:[#allocation2 + $0x100] sm:$0xf]
    %v102 = vld [vmem:[#allocation2 + $0x104] sm:$0xf]
    %v103 = vld [vmem:[#allocation2 + $0x108] sm:$0xf]
    %v104 = vld [vmem:[#allocation2 + $0x10c] sm:$0xf]
    %v105 = vld [vmem:[#allocation2 + $0x110] sm:$0xf]
    %v106 = vld [vmem:[#allocation2 + $0x114] sm:$0xf]
    %v107 = vld [vmem:[#allocation2 + $0x118] sm:$0xf]
    %v108 = vld [vmem:[#allocation2 + $0x11c] sm:$0xf]
    %v109 = vld [vmem:[#allocation2 + $0x120] sm:$0xf]
    %v110 = vld [vmem:[#allocation2 + $0x124] sm:$0xf]
    %v111 = vld [vmem:[#allocation2 + $0x128] sm:$0xf]
    %v112 = vld [vmem:[#allocation2 + $0x12c] sm:$0xf]
    %v113 = vld [vmem:[#allocation2 + $0x130] sm:$0xf]
    %v114 = vld [vmem:[#allocation2 + $0x134] sm:$0xf]
    %v115 = vld [vmem:[#allocation2 + $0x138] sm:$0xf]
    %v116 = vld [vmem:[#allocation2 + $0x13c] sm:$0xf]
    %v117 = vld [vmem:[#allocation2 + $0x140] sm:$0xf]
    %v118 = vld [vmem:[#allocation2 + $0x144] sm:$0xf]
    %v119 = vld [vmem:[#allocation2 + $0x148] sm:$0xf]
    %v120 = vld [vmem:[#allocation2 + $0x14c] sm:$0xf]
    %v121 = vld [vmem:[#allocation2 + $0x150] sm:$0xf]
    %v122 = vld [vmem:[#allocation2 + $0x154] sm:$0xf]
    %v123 = vld [vmem:[#allocation2 + $0x158] sm:$0xf]
    %v124 = vld [vmem:[#allocation2 + $0x15c] sm:$0xf]
    %v125 = vld [vmem:[#allocation2 + $0x160] sm:$0xf]
    %v126 = vld [vmem:[#allocation2 + $0x164] sm:$0xf]
    %v127 = vld [vmem:[#allocation2 + $0x168] sm:$0xf]
    %v128 = vld [vmem:[#allocation2 + $0x16c] sm:$0xf]
    %v129 = vld [vmem:[#allocation2 + $0x170] sm:$0xf]
    %v130 = vld [vmem:[#allocation2 + $0x174] sm:$0xf]
    %v131 = vld [vmem:[#allocation2 + $0x178] sm:$0xf]
    %v132 = vld [vmem:[#allocation2 + $0x17c] sm:$0xf]
    %v133 = vld [vmem:[#allocation2 + $0x180] sm:$0xf]
    %v134 = vld [vmem:[#allocation2 + $0x184] sm:$0xf]
    %v135 = vld [vmem:[%s2] sm:$0x1]
    %v137 = vlaneseq
    %v138 = vshrl.u32 %v137, 7
    %v139 = vsub.s32 0, %v138
    %v140 = vrot.slane %v135, %v139
    %v150 = vunpack.c.l.b16 %v29
    %v151 = vunpack.c.h.b16 %v29
    %v152 = vunpack.c.l.b16 %v30
    %v153 = vunpack.c.h.b16 %v30
    %v154 = vunpack.c.l.b16 %v31
    %v155 = vunpack.c.h.b16 %v31
    %v156 = vunpack.c.l.b16 %v32
    %v157 = vunpack.c.l.b16 %v33
    %v158 = vunpack.c.h.b16 %v33
    %v159 = vunpack.c.l.b16 %v34
    %v160 = vunpack.c.h.b16 %v34
    %v161 = vunpack.c.l.b16 %v35
    %v162 = vunpack.c.h.b16 %v35
    %v163 = vunpack.c.l.b16 %v36
    %v164 = vpack.c.b16 %v157, %v150
    %v165 = vpack.c.b16 %v158, %v151
    %v166 = vpack.c.b16 %v159, %v152
    %v167 = vpack.c.b16 %v160, %v153
    %v168 = vpack.c.b16 %v161, %v154
    %v169 = vpack.c.b16 %v162, %v155
    %v170 = vpack.c.b16 %v163, %v156
    %v275 = vunpack.c.l.b16 %v37
    %v276 = vunpack.c.l.b16 %v38
    %v277 = vunpack.c.l.b16 %v39
    %v278 = vunpack.c.l.b16 %v40
    %v279 = vunpack.c.l.b16 %v41
    %v280 = vunpack.c.l.b16 %v42
    %v281 = vunpack.c.l.b16 %v43
    %v282 = vunpack.c.l.b16 %v44
    %v283 = vunpack.c.l.b16 %v45
    %v284 = vunpack.c.l.b16 %v46
    %v285 = vunpack.c.l.b16 %v47
    %v286 = vunpack.c.l.b16 %v48
    %v287 = vunpack.c.l.b16 %v49
    %v288 = vunpack.c.l.b16 %v50
    %v289 = vunpack.c.l.b16 %v51
    %v290 = vunpack.c.l.b16 %v52
    %v291 = vunpack.c.l.b16 %v53
    %v292 = vunpack.c.l.b16 %v54
    %v293 = vunpack.c.l.b16 %v55
    %v294 = vunpack.c.l.b16 %v56
    %v295 = vunpack.c.l.b16 %v57
    %v296 = vunpack.c.l.b16 %v58
    %v297 = vunpack.c.l.b16 %v59
    %v298 = vunpack.c.l.b16 %v60
    %v299 = vunpack.c.l.b16 %v61
    %v300 = vunpack.c.l.b16 %v62
    %v301 = vunpack.c.l.b16 %v63
    %v302 = vunpack.c.l.b16 %v64
    %v303 = vunpack.c.l.b16 %v65
    %v304 = vunpack.c.l.b16 %v66
    %v305 = vunpack.c.l.b16 %v67
    %v306 = vunpack.c.l.b16 %v68
    %v307 = vunpack.c.l.b16 %v69
    %v308 = vunpack.c.l.b16 %v70
    %v309 = vunpack.c.l.b16 %v71
    %v310 = vunpack.c.l.b16 %v72
    %v311 = vunpack.c.l.b16 %v73
    %v312 = vunpack.c.l.b16 %v74
    %v313 = vunpack.c.l.b16 %v75
    %v314 = vunpack.c.l.b16 %v76
    %v315 = vunpack.c.l.b16 %v77
    %v316 = vunpack.c.l.b16 %v78
    %v317 = vunpack.c.l.b16 %v79
    %v318 = vunpack.c.l.b16 %v80
    %v319 = vunpack.c.l.b16 %v81
    %v320 = vunpack.c.l.b16 %v82
    %v321 = vunpack.c.l.b16 %v83
    %v322 = vunpack.c.l.b16 %v84
    %v323 = vunpack.c.l.b16 %v85
    %v324 = vunpack.c.l.b16 %v86
    %v325 = vunpack.c.l.b16 %v87
    %v326 = vunpack.c.l.b16 %v88
    %v327 = vunpack.c.l.b16 %v89
    %v328 = vunpack.c.l.b16 %v90
    %v329 = vunpack.c.l.b16 %v91
    %v330 = vunpack.c.l.b16 %v92
    %v331 = vunpack.c.l.b16 %v93
    %v332 = vunpack.c.l.b16 %v94
    %v333 = vunpack.c.l.b16 %v95
    %v334 = vunpack.c.l.b16 %v96
    %v335 = vunpack.c.l.b16 %v97
    %v336 = vunpack.c.l.b16 %v98
    %v337 = vunpack.c.l.b16 %v99
    %v338 = vunpack.c.l.b16 %v100
    %v339 = vunpack.c.l.b16 %v101
    %v340 = vunpack.c.l.b16 %v102
    %v341 = vunpack.c.l.b16 %v103
    %v342 = vunpack.c.l.b16 %v104
    %v343 = vunpack.c.l.b16 %v105
    %v344 = vunpack.c.l.b16 %v106
    %v345 = vunpack.c.l.b16 %v107
    %v346 = vunpack.c.l.b16 %v108
    %v347 = vunpack.c.l.b16 %v109
    %v348 = vunpack.c.l.b16 %v110
    %v349 = vunpack.c.l.b16 %v111
    %v350 = vunpack.c.l.b16 %v112
    %v351 = vunpack.c.l.b16 %v113
    %v352 = vunpack.c.l.b16 %v114
    %v353 = vunpack.c.l.b16 %v115
    %v354 = vunpack.c.l.b16 %v116
    %v355 = vunpack.c.l.b16 %v117
    %v356 = vunpack.c.l.b16 %v118
    %v357 = vunpack.c.l.b16 %v119
    %v358 = vunpack.c.l.b16 %v120
    %v359 = vunpack.c.l.b16 %v121
    %v360 = vunpack.c.l.b16 %v122
    %v361 = vunpack.c.l.b16 %v123
    %v362 = vunpack.c.l.b16 %v124
    %v363 = vunpack.c.l.b16 %v125
    %v364 = vunpack.c.l.b16 %v126
    %v365 = vunpack.c.l.b16 %v127
    %v366 = vunpack.c.l.b16 %v128
    %v367 = vunpack.c.l.b16 %v129
    %v368 = vunpack.c.l.b16 %v130
    %v369 = vunpack.c.l.b16 %v131
    %v370 = vunpack.c.l.b16 %v132
    %v371 = vunpack.c.l.b16 %v133
    %v372 = vunpack.c.l.b16 %v134
    %v373 = vpack.c.b16 %v276, %v275
    %v374 = vpack.c.b16 %v278, %v277
    %v375 = vpack.c.b16 %v280, %v279
    %v376 = vpack.c.b16 %v282, %v281
    %v377 = vpack.c.b16 %v284, %v283
    %v378 = vpack.c.b16 %v286, %v285
    %v379 = vpack.c.b16 %v288, %v287
    %v380 = vpack.c.b16 %v290, %v289
    %v381 = vpack.c.b16 %v292, %v291
    %v382 = vpack.c.b16 %v294, %v293
    %v383 = vpack.c.b16 %v296, %v295
    %v384 = vpack.c.b16 %v298, %v297
    %v385 = vpack.c.b16 %v300, %v299
    %v386 = vpack.c.b16 %v302, %v301
    %v387 = vpack.c.b16 %v304, %v303
    %v388 = vpack.c.b16 %v306, %v305
    %v389 = vpack.c.b16 %v308, %v307
    %v390 = vpack.c.b16 %v310, %v309
    %v391 = vpack.c.b16 %v312, %v311
    %v392 = vpack.c.b16 %v314, %v313
    %v393 = vpack.c.b16 %v316, %v315
    %v394 = vpack.c.b16 %v318, %v317
    %v395 = vpack.c.b16 %v320, %v319
    %v396 = vpack.c.b16 %v322, %v321
    %v397 = vpack.c.b16 %v324, %v323
    %v398 = vpack.c.b16 %v326, %v325
    %v399 = vpack.c.b16 %v328, %v327
    %v400 = vpack.c.b16 %v330, %v329
    %v401 = vpack.c.b16 %v332, %v331
    %v402 = vpack.c.b16 %v334, %v333
    %v403 = vpack.c.b16 %v336, %v335
    %v404 = vpack.c.b16 %v338, %v337
    %v405 = vpack.c.b16 %v340, %v339
    %v406 = vpack.c.b16 %v342, %v341
    %v407 = vpack.c.b16 %v344, %v343
    %v408 = vpack.c.b16 %v346, %v345
    %v409 = vpack.c.b16 %v348, %v347
    %v410 = vpack.c.b16 %v350, %v349
    %v411 = vpack.c.b16 %v352, %v351
    %v412 = vpack.c.b16 %v354, %v353
    %v413 = vpack.c.b16 %v356, %v355
    %v414 = vpack.c.b16 %v358, %v357
    %v415 = vpack.c.b16 %v360, %v359
    %v416 = vpack.c.b16 %v362, %v361
    %v417 = vpack.c.b16 %v364, %v363
    %v418 = vpack.c.b16 %v366, %v365
    %v419 = vpack.c.b16 %v368, %v367
    %v420 = vpack.c.b16 %v370, %v369
    %v421 = vpack.c.b16 %v372, %v371
    %vm471 = vcmask 130048
    %v473 = vsel %vm471, %v170, 0
    %475 = vmatprep.subr.bf16.mxu0 0
    %476 = vmatpush1.bf16.msra.mxu0 %v380
    %477 = vmatprep.subr.bf16.mxu0 0
    %478 = vmatpush1.bf16.msra.mxu0 %v379
    %479 = vmatprep.subr.bf16.mxu0 0
    %480 = vmatpush1.bf16.msra.mxu0 %v378
    %481 = vmatprep.subr.bf16.mxu0 0
    %482 = vmatpush1.bf16.msra.mxu0 %v377
    %483 = vmatprep.subr.bf16.mxu0 0
    %484 = vmatpush1.bf16.msra.mxu0 %v376
    %485 = vmatprep.subr.bf16.mxu0 0
    %486 = vmatpush1.bf16.msra.mxu0 %v375
    %487 = vmatprep.subr.bf16.mxu0 0
    %488 = vmatpush1.bf16.msra.mxu0 %v374
    %489 = vmatprep.subr.bf16.mxu0 0
    %490 = vmatpush1.bf16.msra.mxu0 %v373
    %491 = vmatprep.subr.bf16.mxu0 0
    %492 = vmatpush2.bf16.msra.mxu0 %v388
    %493 = vmatprep.subr.bf16.mxu0 0
    %494 = vmatpush2.bf16.msra.mxu0 %v387
    %495 = vmatprep.subr.bf16.mxu0 0
    %496 = vmatpush2.bf16.msra.mxu0 %v386
    %497 = vmatprep.subr.bf16.mxu0 0
    %498 = vmatpush2.bf16.msra.mxu0 %v385
    %499 = vmatprep.subr.bf16.mxu0 0
    %500 = vmatpush2.bf16.msra.mxu0 %v384
    %501 = vmatprep.subr.bf16.mxu0 0
    %502 = vmatpush2.bf16.msra.mxu0 %v383
    %503 = vmatprep.subr.bf16.mxu0 0
    %504 = vmatpush2.bf16.msra.mxu0 %v382
    %505 = vmatprep.subr.bf16.mxu0 0
    %506 = vmatpush2.bf16.msra.mxu0 %v381
    %507 = vmatprep.mubr.bf16.mxu0 %v165
    %508 = vmatmul.mubr.bf16.gmra.mxu0 %v164
    %v509 = vpop.f32.mrf.mxu0
    %v510 = vadd.f32 %v140, %v509
    %v511 = vpop.f32.mrf.mxu0
    %v512 = vpop.f32.mrf.mxu0
    %v513 = vadd.f32 %v140, %v512
    %v514 = vpop.f32.mrf.mxu0
    %515 = vdwg.mxu0
    %516 = vmatprep.subr.bf16.mxu0 0
    %517 = vmatpush1.bf16.msra.mxu0 %v396
    %518 = vmatprep.subr.bf16.mxu0 0
    %519 = vmatpush1.bf16.msra.mxu0 %v395
    %520 = vmatprep.subr.bf16.mxu0 0
    %521 = vmatpush1.bf16.msra.mxu0 %v394
    %522 = vmatprep.subr.bf16.mxu0 0
    %523 = vmatpush1.bf16.msra.mxu0 %v393
    %524 = vmatprep.subr.bf16.mxu0 0
    %525 = vmatpush1.bf16.msra.mxu0 %v392
    %526 = vmatprep.subr.bf16.mxu0 0
    %527 = vmatpush1.bf16.msra.mxu0 %v391
    %528 = vmatprep.subr.bf16.mxu0 0
    %529 = vmatpush1.bf16.msra.mxu0 %v390
    %530 = vmatprep.subr.bf16.mxu0 0
    %531 = vmatpush1.bf16.msra.mxu0 %v389
    %532 = vmatprep.subr.bf16.mxu0 0
    %533 = vmatpush2.bf16.msra.mxu0 %v404
    %534 = vmatprep.subr.bf16.mxu0 0
    %535 = vmatpush2.bf16.msra.mxu0 %v403
    %536 = vmatprep.subr.bf16.mxu0 0
    %537 = vmatpush2.bf16.msra.mxu0 %v402
    %538 = vmatprep.subr.bf16.mxu0 0
    %539 = vmatpush2.bf16.msra.mxu0 %v401
    %540 = vmatprep.subr.bf16.mxu0 0
    %541 = vmatpush2.bf16.msra.mxu0 %v400
    %542 = vmatprep.subr.bf16.mxu0 0
    %543 = vmatpush2.bf16.msra.mxu0 %v399
    %544 = vmatprep.subr.bf16.mxu0 0
    %545 = vmatpush2.bf16.msra.mxu0 %v398
    %546 = vmatprep.subr.bf16.mxu0 0
    %547 = vmatpush2.bf16.msra.mxu0 %v397
    %548 = vmatprep.mubr.bf16.mxu0 %v167
    %549 = vmatmul.mubr.bf16.gmra.mxu0 %v166
    %v550 = vpop.f32.mrf.mxu0
    %v551 = vadd.f32 %v510, %v550
    %v552 = vpop.f32.mrf.mxu0
    %v553 = vpop.f32.mrf.mxu0
    %v554 = vadd.f32 %v513, %v553
    %v555 = vpop.f32.mrf.mxu0
    %556 = vdwg.mxu0
    %557 = vmatprep.subr.bf16.mxu0 0
    %558 = vmatpush1.bf16.msra.mxu0 %v412
    %559 = vmatprep.subr.bf16.mxu0 0
    %560 = vmatpush1.bf16.msra.mxu0 %v411
    %561 = vmatprep.subr.bf16.mxu0 0
    %562 = vmatpush1.bf16.msra.mxu0 %v410
    %563 = vmatprep.subr.bf16.mxu0 0
    %564 = vmatpush1.bf16.msra.mxu0 %v409
    %565 = vmatprep.subr.bf16.mxu0 0
    %566 = vmatpush1.bf16.msra.mxu0 %v408
    %567 = vmatprep.subr.bf16.mxu0 0
    %568 = vmatpush1.bf16.msra.mxu0 %v407
    %569 = vmatprep.subr.bf16.mxu0 0
    %570 = vmatpush1.bf16.msra.mxu0 %v406
    %571 = vmatprep.subr.bf16.mxu0 0
    %572 = vmatpush1.bf16.msra.mxu0 %v405
    %573 = vmatprep.subr.bf16.mxu0 0
    %574 = vmatpush2.bf16.msra.mxu0 %v420
    %575 = vmatprep.subr.bf16.mxu0 0
    %576 = vmatpush2.bf16.msra.mxu0 %v419
    %577 = vmatprep.subr.bf16.mxu0 0
    %578 = vmatpush2.bf16.msra.mxu0 %v418
    %579 = vmatprep.subr.bf16.mxu0 0
    %580 = vmatpush2.bf16.msra.mxu0 %v417
    %581 = vmatprep.subr.bf16.mxu0 0
    %582 = vmatpush2.bf16.msra.mxu0 %v416
    %583 = vmatprep.subr.bf16.mxu0 0
    %584 = vmatpush2.bf16.msra.mxu0 %v415
    %585 = vmatprep.subr.bf16.mxu0 0
    %586 = vmatpush2.bf16.msra.mxu0 %v414
    %587 = vmatprep.subr.bf16.mxu0 0
    %588 = vmatpush2.bf16.msra.mxu0 %v413
    %589 = vmatprep.mubr.bf16.mxu0 %v169
    %590 = vmatmul.mubr.bf16.gmra.mxu0 %v168
    %v591 = vpop.f32.mrf.mxu0
    %v592 = vadd.f32 %v551, %v591
    %v593 = vpop.f32.mrf.mxu0
    %v594 = vpop.f32.mrf.mxu0
    %v595 = vadd.f32 %v554, %v594
    %v596 = vpop.f32.mrf.mxu0
    %597 = vdwg.mxu0
    %598 = vmatprep.subr.bf16.mxu0 0
    %599 = vmatpush1.bf16.msra.mxu0 0
    %600 = vmatprep.subr.bf16.mxu0 0
    %601 = vmatpush1.bf16.msra.mxu0 0
    %602 = vmatprep.subr.bf16.mxu0 0
    %603 = vmatpush1.bf16.msra.mxu0 0
    %604 = vmatprep.subr.bf16.mxu0 0
    %605 = vmatpush1.bf16.msra.mxu0 0
    %606 = vmatprep.subr.bf16.mxu0 0
    %607 = vmatpush1.bf16.msra.mxu0 0
    %608 = vmatprep.subr.bf16.mxu0 0
    %609 = vmatpush1.bf16.msra.mxu0 0
    %610 = vmatprep.subr.bf16.mxu0 0
    %611 = vmatpush1.bf16.msra.mxu0 0
    %612 = vmatprep.subr.bf16.mxu0 0
    %613 = vmatpush1.bf16.msra.mxu0 %v421
    %614 = vmatprep.subr.bf16.mxu0 0
    %615 = vmatpush2.bf16.msra.mxu0 0
    %616 = vmatprep.subr.bf16.mxu0 0
    %617 = vmatpush2.bf16.msra.mxu0 0
    %618 = vmatprep.subr.bf16.mxu0 0
    %619 = vmatpush2.bf16.msra.mxu0 0
    %620 = vmatprep.subr.bf16.mxu0 0
    %621 = vmatpush2.bf16.msra.mxu0 0
    %622 = vmatprep.subr.bf16.mxu0 0
    %623 = vmatpush2.bf16.msra.mxu0 0
    %624 = vmatprep.subr.bf16.mxu0 0
    %625 = vmatpush2.bf16.msra.mxu0 0
    %626 = vmatprep.subr.bf16.mxu0 0
    %627 = vmatpush2.bf16.msra.mxu0 0
    %628 = vmatprep.subr.bf16.mxu0 0
    %629 = vmatpush2.bf16.msra.mxu0 0
    %630 = vmatprep.mubr.bf16.mxu0 0
    %631 = vmatmul.mubr.bf16.gmra.mxu0 %v473
    %v632 = vpop.f32.mrf.mxu0
    %v633 = vadd.f32 %v592, %v632
    %v634 = vpop.f32.mrf.mxu0
    %v635 = vpop.f32.mrf.mxu0
    %v636 = vadd.f32 %v595, %v635
    %v637 = vpop.f32.mrf.mxu0
    %638 = vdwg.mxu0
    %639 = vst [vmem:[%s3] sm:$0xff] %v633
    %640 = vst [vmem:[%s3 + $0x8] sm:$0xff] %v636
    // Predicated region
    $region18: #{mnist_model_forward.1} parent=1 // pred_check
      _
    $region19: #{mnist_model_forward.1} parent=1 // pred_check_branch
      %642 = sbr.rel (0) target = $region21
    $region20: #{mnist_model_forward.1} parent=1 // pred_region
      _
    $region21: #{mnist_model_forward.1} parent=1 // pred_fallthru
      _
    // Predicated region
    $region22: #{mnist_model_forward.1} parent=1 // pred_check
      _
    $region23: #{mnist_model_forward.1} parent=1 // pred_check_branch
      %644 = sbr.rel (0) target = $region25
    $region24: #{mnist_model_forward.1} parent=1 // pred_region
      _
    $region25: #{mnist_model_forward.1} parent=1 // pred_fallthru
      _
    %645 = vsyncpa [#allocation3], 1

</llo_original>
